<compile_context>
chip_gen: v7x
topology: tpu7x:2x2x1
jax: 0.10.0
libtpu: 0.0.40
codegen_flags: <defaults>
</compile_context>

<pallas_src>
import jax
import jax.numpy as jnp
from jax.experimental import pallas as pl
from jax.experimental.pallas import tpu as pltpu


def _round_up(x, m):
    return (x + m - 1) // m * m


def _make_kernel(TS, H, S_pad, num_types, eps=1e-12):
    def kernel(wid_ref,      # (B*S_pad,) int32, SMEM (scalar prefetch)
               word_hbm,     # (V, H) HBM (memory_space=pl.ANY), native dtype
               pos_ref,      # (S_pad, H) f32, VMEM (fully resident)
               type_ref,     # (TV, H) f32, VMEM (fully resident)
               tt_ref,       # (TS, 1) int32, VMEM
               gamma_ref,    # (1, H) f32
               beta_ref,     # (1, H) f32
               out_ref,      # (TS, H) f32
               wstage,       # (2, TS, H) VMEM scratch (gathered word rows)
               sem):         # DMA semaphores, shape (2,)
        b = pl.program_id(0)
        s = pl.program_id(1)
        n_s = pl.num_programs(1)
        slot = s % 2

        def issue_gather(tile_s, slot_idx):
            base = b * S_pad + tile_s * TS

            def body(r, carry):
                row = wid_ref[base + r]
                pltpu.make_async_copy(
                    word_hbm.at[pl.ds(row, 1), :],
                    wstage.at[slot_idx, pl.ds(r, 1), :],
                    sem.at[slot_idx],
                ).start()
                return carry

            # Partial unroll: scalar id read co-issues with descriptor push.
            jax.lax.fori_loop(0, TS, body, 0, unroll=8)

        # Prime the current slot at the start of each batch row (the seq axis
        # is "arbitrary" => sequential per core; batch may be core-parallel).
        @pl.when(s == 0)
        def _prime():
            issue_gather(0, 0)

        # Prefetch the next seq tile's word rows into the other slot so its
        # gather overlaps this tile's compute + writeback.
        @pl.when(s + 1 < n_s)
        def _prefetch():
            issue_gather(s + 1, (s + 1) % 2)

        # Single consolidated wait: sized exactly as TS rows of the actual
        # gathered dtype; matches the byte total of the TS per-row DMAs that
        # share sem[slot].
        pltpu.make_async_copy(
            word_hbm.at[pl.ds(0, TS), :],
            wstage.at[slot],
            sem.at[slot],
        ).wait()

        # ---- fused add + token-type select + LayerNorm ----------------------
        start = pl.multiple_of(s * TS, TS)
        x = wstage[slot].astype(jnp.float32) + pos_ref[pl.ds(start, TS), :]

        tt = tt_ref[...]                                    # (TS, 1) int32
        if num_types == 2:
            temb = jnp.where(tt == 0, type_ref[0:1, :], type_ref[1:2, :])
        else:
            temb = jnp.zeros_like(x)
            for k in range(num_types):                      # tiny static loop
                temb = temb + jnp.where(tt == k, type_ref[k:k + 1, :], 0.0)
        x = x + temb

        mean = jnp.mean(x, axis=-1, keepdims=True)
        xc = x - mean
        var = jnp.mean(xc * xc, axis=-1, keepdims=True)     # biased (PyTorch LN)
        inv = jax.lax.rsqrt(var + eps)
        out_ref[...] = xc * inv * gamma_ref[...] + beta_ref[...]

    return kernel


def bert_embeddings(input_ids, token_type_ids, word_emb, pos_emb, type_emb,
                    gamma, beta, *, tokens_per_tile=512):
    B, S = input_ids.shape
    V, H = word_emb.shape
    TV = type_emb.shape[0]

    # Sequence-tile size: multiple of 8 sublanes, capped by the padded seq len.
    TS = min(tokens_per_tile, _round_up(S, 8))
    TS = max(8, _round_up(TS, 8))
    S_pad = _round_up(S, TS)
    n_s = S_pad // TS
    pad = S_pad - S

    ids = jnp.pad(input_ids.astype(jnp.int32), ((0, 0), (0, pad)))
    tts = jnp.pad(token_type_ids.astype(jnp.int32), ((0, 0), (0, pad)))
    wid = ids.reshape(B * S_pad)           # only scalar-prefetch array (SMEM)
    tt3 = tts.reshape(B, S_pad, 1)

    # Contiguous, fully VMEM-resident position slab (S_pad*H*4 bytes only).
    pos = jnp.pad(pos_emb[:S].astype(jnp.float32), ((0, pad), (0, 0)))

    # Word table stays in its native dtype in HBM (no full-table copy).
    type_f32 = type_emb.astype(jnp.float32)
    gamma2 = gamma.reshape(1, H).astype(jnp.float32)
    beta2 = beta.reshape(1, H).astype(jnp.float32)

    kernel = _make_kernel(TS, H, S_pad, TV)

    grid_spec = pltpu.PrefetchScalarGridSpec(
        num_scalar_prefetch=1,
        grid=(B, n_s),
        in_specs=[
            pl.BlockSpec(memory_space=pl.ANY),                          # word table (HBM)
            pl.BlockSpec((S_pad, H), lambda b, s, wid: (0, 0)),         # pos slab (resident)
            pl.BlockSpec((TV, H), lambda b, s, wid: (0, 0)),            # type table (resident)
            pl.BlockSpec((None, TS, 1), lambda b, s, wid: (b, s, 0)),   # token-type ids
            pl.BlockSpec((1, H), lambda b, s, wid: (0, 0)),             # gamma
            pl.BlockSpec((1, H), lambda b, s, wid: (0, 0)),             # beta
        ],
        out_specs=pl.BlockSpec((None, TS, H), lambda b, s, wid: (b, s, 0)),
        scratch_shapes=[
            pltpu.VMEM((2, TS, H), word_emb.dtype),   # double-buffered gather staging
            pltpu.SemaphoreType.DMA((2,)),            # one gather semaphore per slot
        ],
    )

    out = pl.pallas_call(
        kernel,
        out_shape=jax.ShapeDtypeStruct((B, S_pad, H), jnp.float32),
        grid_spec=grid_spec,
        compiler_params=pltpu.CompilerParams(
            # Seq-tile axis must be sequential (carried wstage/sem state);
            # batch axis may be split across TensorCores on v7x.
            dimension_semantics=("parallel", "arbitrary")),
    )(wid, word_emb, pos, type_f32, tt3, gamma2, beta2)

    return out[:, :S, :]


def _reference(input_ids, token_type_ids, word_emb, pos_emb, type_emb, gamma, beta):
    B, S = input_ids.shape
    pos_ids = jnp.broadcast_to(jnp.arange(S), (B, S))
    x = word_emb[input_ids] + pos_emb[pos_ids] + type_emb[token_type_ids]
    mean = jnp.mean(x, axis=-1, keepdims=True)
    var = jnp.mean((x - mean) ** 2, axis=-1, keepdims=True)
    return (x - mean) * jax.lax.rsqrt(var + 1e-12) * gamma + beta


if __name__ == "__main__":
    # Small shapes consistent with the module's forward; S not a multiple of 8
    # exercises padding, tokens_per_tile=8 exercises the multi-tile prefetch
    # path, and the default tile size exercises the single-tile path.
    B, S, H = 2, 12, 256
    vocab_size = 1000
    max_position_embeddings = 64
    type_vocab_size = 2

    key = jax.random.PRNGKey(0)
    k_w, k_p, k_t, k_ids, k_tt = jax.random.split(key, 5)

    # nn.Embedding default init ~ N(0, 1); LayerNorm gamma=1, beta=0.
    word_emb = jax.random.normal(k_w, (vocab_size, H), dtype=jnp.float32)
    pos_emb = jax.random.normal(k_p, (max_position_embeddings, H), dtype=jnp.float32)
    type_emb = jax.random.normal(k_t, (type_vocab_size, H), dtype=jnp.float32)
    gamma = jnp.ones((H,), dtype=jnp.float32)
    beta = jnp.zeros((H,), dtype=jnp.float32)

    input_ids = jax.random.randint(k_ids, (B, S), 0, vocab_size, dtype=jnp.int32)
    token_type_ids = jax.random.randint(k_tt, (B, S), 0, type_vocab_size, dtype=jnp.int32)

    ref = _reference(input_ids, token_type_ids, word_emb, pos_emb, type_emb, gamma, beta)

    # Multi-tile path (double-buffered cross-step gather prefetch + tail padding).
    out = bert_embeddings(input_ids, token_type_ids, word_emb, pos_emb,
                          type_emb, gamma, beta, tokens_per_tile=8)
    out = jax.block_until_ready(out)
    assert out.shape == (B, S, H)
    assert jnp.allclose(out, ref, atol=1e-5, rtol=1e-5)

    # Single-tile path (default tile size covers the whole padded sequence).
    out2 = bert_embeddings(input_ids, token_type_ids, word_emb, pos_emb,
                           type_emb, gamma, beta)
    out2 = jax.block_until_ready(out2)
    assert jnp.allclose(out2, ref, atol=1e-5, rtol=1e-5)

    print("KERNEL_OK")
</pallas_src>

<mosaic_0001>
module attributes {stable_mosaic.version = 11 : i64} {
  func.func @kernel(%arg0: i32, %arg1: i32, %arg2: memref<32xi32, #tpu.memory_space<smem>>, %arg3: memref<1000x256xf32, #tpu.memory_space<any>>, %arg4: memref<16x256xf32, #tpu.memory_space<vmem>>, %arg5: memref<2x256xf32, #tpu.memory_space<vmem>>, %arg6: memref<1x8x1xi32, #tpu.memory_space<vmem>>, %arg7: memref<1x256xf32, #tpu.memory_space<vmem>>, %arg8: memref<1x256xf32, #tpu.memory_space<vmem>>, %arg9: memref<1x8x256xf32, #tpu.memory_space<vmem>>, %arg10: memref<2x8x256xf32, #tpu.memory_space<vmem>>, %arg11: memref<2x!tpu.dma_semaphore, #tpu.memory_space<semaphore_mem>>) attributes {dimension_semantics = [#tpu.dimension_semantics<parallel>, #tpu.dimension_semantics<arbitrary>], iteration_bounds = array<i64: 2, 2>, scalar_prefetch = 1 : i64, scratch_operands = 2 : i64, tpu.core_type = #tpu.core_type<tc>, window_params = [{}, {pipeline_mode = #tpu.pipeline_mode<synchronous>, transform_indices = @transform_1, window_bounds = array<i64: 16, 256>}, {pipeline_mode = #tpu.pipeline_mode<synchronous>, transform_indices = @transform_2, window_bounds = array<i64: 2, 256>}, {transform_indices = @transform_3, window_bounds = array<i64: 1, 8, 1>}, {pipeline_mode = #tpu.pipeline_mode<synchronous>, transform_indices = @transform_4, window_bounds = array<i64: 1, 256>}, {pipeline_mode = #tpu.pipeline_mode<synchronous>, transform_indices = @transform_5, window_bounds = array<i64: 1, 256>}, {transform_indices = @transform_6, window_bounds = array<i64: 1, 8, 256>}]} {
    %c2_i32 = arith.constant 2 : i32
    %c0_i32 = arith.constant 0 : i32
    %0 = arith.cmpi eq, %c2_i32, %c0_i32 : i32
    %c1_i32 = arith.constant 1 : i32
    %1 = arith.select %0, %c1_i32, %c2_i32 : i32
    %2 = arith.remsi %arg1, %1 : i32
    %c0_i32_0 = arith.constant 0 : i32
    %3 = arith.cmpi ne, %2, %c0_i32_0 : i32
    %c0_i32_1 = arith.constant 0 : i32
    %4 = arith.cmpi slt, %2, %c0_i32_1 : i32
    %c0_i32_2 = arith.constant 0 : i32
    %5 = arith.cmpi slt, %1, %c0_i32_2 : i32
    %6 = arith.xori %4, %5 : i1
    %7 = arith.andi %6, %3 : i1
    %8 = arith.addi %2, %1 : i32
    %9 = arith.select %7, %8, %2 : i32
    %c0_i32_3 = arith.constant 0 : i32
    %10 = arith.cmpi eq, %arg1, %c0_i32_3 : i32
    %11 = arith.extui %10 : i1 to i32
    %c0_i32_4 = arith.constant 0 : i32
    %12 = arith.cmpi ne, %11, %c0_i32_4 : i32
    scf.if %12 {
      %c16_i32 = arith.constant 16 : i32
      %69 = arith.muli %arg0, %c16_i32 : i32
      %c0_i32_32 = arith.constant 0 : i32
      %70 = arith.addi %69, %c0_i32_32 : i32
      %c0_i32_33 = arith.constant 0 : i32
      %71 = arith.addi %70, %c0_i32_33 : i32
      %72 = arith.index_cast %71 : i32 to index
      %73 = memref.load %arg2[%72] : memref<32xi32, #tpu.memory_space<smem>>
      %c0_i32_34 = arith.constant 0 : i32
      %c0_i32_35 = arith.constant 0 : i32
      %c0_i32_36 = arith.constant 0 : i32
      %74 = tpu.memref_slice %arg3[%73, %c0_i32_36] : memref<1000x256xf32, #tpu.memory_space<any>> -> memref<1x256xf32, #tpu.memory_space<any>>
      %c0_i32_37 = arith.constant 0 : i32
      %75 = tpu.memref_slice %arg10[%c0_i32_34, %c0_i32_33, %c0_i32_37] : memref<2x8x256xf32, #tpu.memory_space<vmem>> -> memref<1x1x256xf32, #tpu.memory_space<vmem>>
      %76 = tpu.memref_squeeze %75 : memref<1x1x256xf32, #tpu.memory_space<vmem>> -> memref<1x256xf32, #tpu.memory_space<vmem>>
      %77 = tpu.memref_slice %arg11[%c0_i32_35] : memref<2x!tpu.dma_semaphore, #tpu.memory_space<semaphore_mem>> -> memref<1x!tpu.dma_semaphore, #tpu.memory_space<semaphore_mem>>
      %78 = tpu.memref_squeeze %77 : memref<1x!tpu.dma_semaphore, #tpu.memory_space<semaphore_mem>> -> memref<!tpu.dma_semaphore, #tpu.memory_space<semaphore_mem>>
      tpu.enqueue_dma source(%74 : memref<1x256xf32, #tpu.memory_space<any>>) target(%76 : memref<1x256xf32, #tpu.memory_space<vmem>>) target_semaphore(%78 : memref<!tpu.dma_semaphore, #tpu.memory_space<semaphore_mem>>)
      %c1_i32_38 = arith.constant 1 : i32
      %79 = arith.addi %70, %c1_i32_38 : i32
      %80 = arith.index_cast %79 : i32 to index
      %81 = memref.load %arg2[%80] : memref<32xi32, #tpu.memory_space<smem>>
      %c0_i32_39 = arith.constant 0 : i32
      %c0_i32_40 = arith.constant 0 : i32
      %c0_i32_41 = arith.constant 0 : i32
      %82 = tpu.memref_slice %arg3[%81, %c0_i32_41] : memref<1000x256xf32, #tpu.memory_space<any>> -> memref<1x256xf32, #tpu.memory_space<any>>
      %c0_i32_42 = arith.constant 0 : i32
      %83 = tpu.memref_slice %arg10[%c0_i32_39, %c1_i32_38, %c0_i32_42] : memref<2x8x256xf32, #tpu.memory_space<vmem>> -> memref<1x1x256xf32, #tpu.memory_space<vmem>>
      %84 = tpu.memref_squeeze %83 : memref<1x1x256xf32, #tpu.memory_space<vmem>> -> memref<1x256xf32, #tpu.memory_space<vmem>>
      %85 = tpu.memref_slice %arg11[%c0_i32_40] : memref<2x!tpu.dma_semaphore, #tpu.memory_space<semaphore_mem>> -> memref<1x!tpu.dma_semaphore, #tpu.memory_space<semaphore_mem>>
      %86 = tpu.memref_squeeze %85 : memref<1x!tpu.dma_semaphore, #tpu.memory_space<semaphore_mem>> -> memref<!tpu.dma_semaphore, #tpu.memory_space<semaphore_mem>>
      tpu.enqueue_dma source(%82 : memref<1x256xf32, #tpu.memory_space<any>>) target(%84 : memref<1x256xf32, #tpu.memory_space<vmem>>) target_semaphore(%86 : memref<!tpu.dma_semaphore, #tpu.memory_space<semaphore_mem>>)
      %c2_i32_43 = arith.constant 2 : i32
      %87 = arith.addi %70, %c2_i32_43 : i32
      %88 = arith.index_cast %87 : i32 to index
      %89 = memref.load %arg2[%88] : memref<32xi32, #tpu.memory_space<smem>>
      %c0_i32_44 = arith.constant 0 : i32
      %c0_i32_45 = arith.constant 0 : i32
      %c0_i32_46 = arith.constant 0 : i32
      %90 = tpu.memref_slice %arg3[%89, %c0_i32_46] : memref<1000x256xf32, #tpu.memory_space<any>> -> memref<1x256xf32, #tpu.memory_space<any>>
      %c0_i32_47 = arith.constant 0 : i32
      %91 = tpu.memref_slice %arg10[%c0_i32_44, %c2_i32_43, %c0_i32_47] : memref<2x8x256xf32, #tpu.memory_space<vmem>> -> memref<1x1x256xf32, #tpu.memory_space<vmem>>
      %92 = tpu.memref_squeeze %91 : memref<1x1x256xf32, #tpu.memory_space<vmem>> -> memref<1x256xf32, #tpu.memory_space<vmem>>
      %93 = tpu.memref_slice %arg11[%c0_i32_45] : memref<2x!tpu.dma_semaphore, #tpu.memory_space<semaphore_mem>> -> memref<1x!tpu.dma_semaphore, #tpu.memory_space<semaphore_mem>>
      %94 = tpu.memref_squeeze %93 : memref<1x!tpu.dma_semaphore, #tpu.memory_space<semaphore_mem>> -> memref<!tpu.dma_semaphore, #tpu.memory_space<semaphore_mem>>
      tpu.enqueue_dma source(%90 : memref<1x256xf32, #tpu.memory_space<any>>) target(%92 : memref<1x256xf32, #tpu.memory_space<vmem>>) target_semaphore(%94 : memref<!tpu.dma_semaphore, #tpu.memory_space<semaphore_mem>>)
      %c3_i32 = arith.constant 3 : i32
      %95 = arith.addi %70, %c3_i32 : i32
      %96 = arith.index_cast %95 : i32 to index
      %97 = memref.load %arg2[%96] : memref<32xi32, #tpu.memory_space<smem>>
      %c0_i32_48 = arith.constant 0 : i32
      %c0_i32_49 = arith.constant 0 : i32
      %c0_i32_50 = arith.constant 0 : i32
      %98 = tpu.memref_slice %arg3[%97, %c0_i32_50] : memref<1000x256xf32, #tpu.memory_space<any>> -> memref<1x256xf32, #tpu.memory_space<any>>
      %c0_i32_51 = arith.constant 0 : i32
      %99 = tpu.memref_slice %arg10[%c0_i32_48, %c3_i32, %c0_i32_51] : memref<2x8x256xf32, #tpu.memory_space<vmem>> -> memref<1x1x256xf32, #tpu.memory_space<vmem>>
      %100 = tpu.memref_squeeze %99 : memref<1x1x256xf32, #tpu.memory_space<vmem>> -> memref<1x256xf32, #tpu.memory_space<vmem>>
      %101 = tpu.memref_slice %arg11[%c0_i32_49] : memref<2x!tpu.dma_semaphore, #tpu.memory_space<semaphore_mem>> -> memref<1x!tpu.dma_semaphore, #tpu.memory_space<semaphore_mem>>
      %102 = tpu.memref_squeeze %101 : memref<1x!tpu.dma_semaphore, #tpu.memory_space<semaphore_mem>> -> memref<!tpu.dma_semaphore, #tpu.memory_space<semaphore_mem>>
      tpu.enqueue_dma source(%98 : memref<1x256xf32, #tpu.memory_space<any>>) target(%100 : memref<1x256xf32, #tpu.memory_space<vmem>>) target_semaphore(%102 : memref<!tpu.dma_semaphore, #tpu.memory_space<semaphore_mem>>)
      %c4_i32 = arith.constant 4 : i32
      %103 = arith.addi %70, %c4_i32 : i32
      %104 = arith.index_cast %103 : i32 to index
      %105 = memref.load %arg2[%104] : memref<32xi32, #tpu.memory_space<smem>>
      %c0_i32_52 = arith.constant 0 : i32
      %c0_i32_53 = arith.constant 0 : i32
      %c0_i32_54 = arith.constant 0 : i32
      %106 = tpu.memref_slice %arg3[%105, %c0_i32_54] : memref<1000x256xf32, #tpu.memory_space<any>> -> memref<1x256xf32, #tpu.memory_space<any>>
      %c0_i32_55 = arith.constant 0 : i32
      %107 = tpu.memref_slice %arg10[%c0_i32_52, %c4_i32, %c0_i32_55] : memref<2x8x256xf32, #tpu.memory_space<vmem>> -> memref<1x1x256xf32, #tpu.memory_space<vmem>>
      %108 = tpu.memref_squeeze %107 : memref<1x1x256xf32, #tpu.memory_space<vmem>> -> memref<1x256xf32, #tpu.memory_space<vmem>>
      %109 = tpu.memref_slice %arg11[%c0_i32_53] : memref<2x!tpu.dma_semaphore, #tpu.memory_space<semaphore_mem>> -> memref<1x!tpu.dma_semaphore, #tpu.memory_space<semaphore_mem>>
      %110 = tpu.memref_squeeze %109 : memref<1x!tpu.dma_semaphore, #tpu.memory_space<semaphore_mem>> -> memref<!tpu.dma_semaphore, #tpu.memory_space<semaphore_mem>>
      tpu.enqueue_dma source(%106 : memref<1x256xf32, #tpu.memory_space<any>>) target(%108 : memref<1x256xf32, #tpu.memory_space<vmem>>) target_semaphore(%110 : memref<!tpu.dma_semaphore, #tpu.memory_space<semaphore_mem>>)
      %c5_i32 = arith.constant 5 : i32
      %111 = arith.addi %70, %c5_i32 : i32
      %112 = arith.index_cast %111 : i32 to index
      %113 = memref.load %arg2[%112] : memref<32xi32, #tpu.memory_space<smem>>
      %c0_i32_56 = arith.constant 0 : i32
      %c0_i32_57 = arith.constant 0 : i32
      %c0_i32_58 = arith.constant 0 : i32
      %114 = tpu.memref_slice %arg3[%113, %c0_i32_58] : memref<1000x256xf32, #tpu.memory_space<any>> -> memref<1x256xf32, #tpu.memory_space<any>>
      %c0_i32_59 = arith.constant 0 : i32
      %115 = tpu.memref_slice %arg10[%c0_i32_56, %c5_i32, %c0_i32_59] : memref<2x8x256xf32, #tpu.memory_space<vmem>> -> memref<1x1x256xf32, #tpu.memory_space<vmem>>
      %116 = tpu.memref_squeeze %115 : memref<1x1x256xf32, #tpu.memory_space<vmem>> -> memref<1x256xf32, #tpu.memory_space<vmem>>
      %117 = tpu.memref_slice %arg11[%c0_i32_57] : memref<2x!tpu.dma_semaphore, #tpu.memory_space<semaphore_mem>> -> memref<1x!tpu.dma_semaphore, #tpu.memory_space<semaphore_mem>>
      %118 = tpu.memref_squeeze %117 : memref<1x!tpu.dma_semaphore, #tpu.memory_space<semaphore_mem>> -> memref<!tpu.dma_semaphore, #tpu.memory_space<semaphore_mem>>
      tpu.enqueue_dma source(%114 : memref<1x256xf32, #tpu.memory_space<any>>) target(%116 : memref<1x256xf32, #tpu.memory_space<vmem>>) target_semaphore(%118 : memref<!tpu.dma_semaphore, #tpu.memory_space<semaphore_mem>>)
      %c6_i32 = arith.constant 6 : i32
      %119 = arith.addi %70, %c6_i32 : i32
      %120 = arith.index_cast %119 : i32 to index
      %121 = memref.load %arg2[%120] : memref<32xi32, #tpu.memory_space<smem>>
      %c0_i32_60 = arith.constant 0 : i32
      %c0_i32_61 = arith.constant 0 : i32
      %c0_i32_62 = arith.constant 0 : i32
      %122 = tpu.memref_slice %arg3[%121, %c0_i32_62] : memref<1000x256xf32, #tpu.memory_space<any>> -> memref<1x256xf32, #tpu.memory_space<any>>
      %c0_i32_63 = arith.constant 0 : i32
      %123 = tpu.memref_slice %arg10[%c0_i32_60, %c6_i32, %c0_i32_63] : memref<2x8x256xf32, #tpu.memory_space<vmem>> -> memref<1x1x256xf32, #tpu.memory_space<vmem>>
      %124 = tpu.memref_squeeze %123 : memref<1x1x256xf32, #tpu.memory_space<vmem>> -> memref<1x256xf32, #tpu.memory_space<vmem>>
      %125 = tpu.memref_slice %arg11[%c0_i32_61] : memref<2x!tpu.dma_semaphore, #tpu.memory_space<semaphore_mem>> -> memref<1x!tpu.dma_semaphore, #tpu.memory_space<semaphore_mem>>
      %126 = tpu.memref_squeeze %125 : memref<1x!tpu.dma_semaphore, #tpu.memory_space<semaphore_mem>> -> memref<!tpu.dma_semaphore, #tpu.memory_space<semaphore_mem>>
      tpu.enqueue_dma source(%122 : memref<1x256xf32, #tpu.memory_space<any>>) target(%124 : memref<1x256xf32, #tpu.memory_space<vmem>>) target_semaphore(%126 : memref<!tpu.dma_semaphore, #tpu.memory_space<semaphore_mem>>)
      %c7_i32 = arith.constant 7 : i32
      %127 = arith.addi %70, %c7_i32 : i32
      %128 = arith.index_cast %127 : i32 to index
      %129 = memref.load %arg2[%128] : memref<32xi32, #tpu.memory_space<smem>>
      %c0_i32_64 = arith.constant 0 : i32
      %c0_i32_65 = arith.constant 0 : i32
      %c0_i32_66 = arith.constant 0 : i32
      %130 = tpu.memref_slice %arg3[%129, %c0_i32_66] : memref<1000x256xf32, #tpu.memory_space<any>> -> memref<1x256xf32, #tpu.memory_space<any>>
      %c0_i32_67 = arith.constant 0 : i32
      %131 = tpu.memref_slice %arg10[%c0_i32_64, %c7_i32, %c0_i32_67] : memref<2x8x256xf32, #tpu.memory_space<vmem>> -> memref<1x1x256xf32, #tpu.memory_space<vmem>>
      %132 = tpu.memref_squeeze %131 : memref<1x1x256xf32, #tpu.memory_space<vmem>> -> memref<1x256xf32, #tpu.memory_space<vmem>>
      %133 = tpu.memref_slice %arg11[%c0_i32_65] : memref<2x!tpu.dma_semaphore, #tpu.memory_space<semaphore_mem>> -> memref<1x!tpu.dma_semaphore, #tpu.memory_space<semaphore_mem>>
      %134 = tpu.memref_squeeze %133 : memref<1x!tpu.dma_semaphore, #tpu.memory_space<semaphore_mem>> -> memref<!tpu.dma_semaphore, #tpu.memory_space<semaphore_mem>>
      tpu.enqueue_dma source(%130 : memref<1x256xf32, #tpu.memory_space<any>>) target(%132 : memref<1x256xf32, #tpu.memory_space<vmem>>) target_semaphore(%134 : memref<!tpu.dma_semaphore, #tpu.memory_space<semaphore_mem>>)
      %c8_i32_68 = arith.constant 8 : i32
    } else {
    }
    %c1_i32_5 = arith.constant 1 : i32
    %13 = arith.addi %arg1, %c1_i32_5 : i32
    %c2_i32_6 = arith.constant 2 : i32
    %14 = arith.cmpi slt, %13, %c2_i32_6 : i32
    %15 = arith.extui %14 : i1 to i32
    %c0_i32_7 = arith.constant 0 : i32
    %16 = arith.cmpi ne, %15, %c0_i32_7 : i32
    scf.if %16 {
      %c1_i32_32 = arith.constant 1 : i32
      %69 = arith.addi %arg1, %c1_i32_32 : i32
      %c1_i32_33 = arith.constant 1 : i32
      %70 = arith.addi %arg1, %c1_i32_33 : i32
      %c2_i32_34 = arith.constant 2 : i32
      %c0_i32_35 = arith.constant 0 : i32
      %71 = arith.cmpi eq, %c2_i32_34, %c0_i32_35 : i32
      %c1_i32_36 = arith.constant 1 : i32
      %72 = arith.select %71, %c1_i32_36, %c2_i32_34 : i32
      %73 = arith.remsi %70, %72 : i32
      %c0_i32_37 = arith.constant 0 : i32
      %74 = arith.cmpi ne, %73, %c0_i32_37 : i32
      %c0_i32_38 = arith.constant 0 : i32
      %75 = arith.cmpi slt, %73, %c0_i32_38 : i32
      %c0_i32_39 = arith.constant 0 : i32
      %76 = arith.cmpi slt, %72, %c0_i32_39 : i32
      %77 = arith.xori %75, %76 : i1
      %78 = arith.andi %77, %74 : i1
      %79 = arith.addi %73, %72 : i32
      %80 = arith.select %78, %79, %73 : i32
      %c16_i32 = arith.constant 16 : i32
      %81 = arith.muli %arg0, %c16_i32 : i32
      %c8_i32_40 = arith.constant 8 : i32
      %82 = arith.muli %69, %c8_i32_40 : i32
      %83 = arith.addi %81, %82 : i32
      %c0_i32_41 = arith.constant 0 : i32
      %84 = arith.addi %83, %c0_i32_41 : i32
      %85 = arith.index_cast %84 : i32 to index
      %86 = memref.load %arg2[%85] : memref<32xi32, #tpu.memory_space<smem>>
      %c0_i32_42 = arith.constant 0 : i32
      %87 = tpu.memref_slice %arg3[%86, %c0_i32_42] : memref<1000x256xf32, #tpu.memory_space<any>> -> memref<1x256xf32, #tpu.memory_space<any>>
      %c0_i32_43 = arith.constant 0 : i32
      %88 = tpu.memref_slice %arg10[%80, %c0_i32_41, %c0_i32_43] : memref<2x8x256xf32, #tpu.memory_space<vmem>> -> memref<1x1x256xf32, #tpu.memory_space<vmem>>
      %89 = tpu.memref_squeeze %88 : memref<1x1x256xf32, #tpu.memory_space<vmem>> -> memref<1x256xf32, #tpu.memory_space<vmem>>
      %90 = tpu.memref_slice %arg11[%80] : memref<2x!tpu.dma_semaphore, #tpu.memory_space<semaphore_mem>> -> memref<1x!tpu.dma_semaphore, #tpu.memory_space<semaphore_mem>>
      %91 = tpu.memref_squeeze %90 : memref<1x!tpu.dma_semaphore, #tpu.memory_space<semaphore_mem>> -> memref<!tpu.dma_semaphore, #tpu.memory_space<semaphore_mem>>
      tpu.enqueue_dma source(%87 : memref<1x256xf32, #tpu.memory_space<any>>) target(%89 : memref<1x256xf32, #tpu.memory_space<vmem>>) target_semaphore(%91 : memref<!tpu.dma_semaphore, #tpu.memory_space<semaphore_mem>>)
      %c1_i32_44 = arith.constant 1 : i32
      %92 = arith.addi %83, %c1_i32_44 : i32
      %93 = arith.index_cast %92 : i32 to index
      %94 = memref.load %arg2[%93] : memref<32xi32, #tpu.memory_space<smem>>
      %c0_i32_45 = arith.constant 0 : i32
      %95 = tpu.memref_slice %arg3[%94, %c0_i32_45] : memref<1000x256xf32, #tpu.memory_space<any>> -> memref<1x256xf32, #tpu.memory_space<any>>
      %c0_i32_46 = arith.constant 0 : i32
      %96 = tpu.memref_slice %arg10[%80, %c1_i32_44, %c0_i32_46] : memref<2x8x256xf32, #tpu.memory_space<vmem>> -> memref<1x1x256xf32, #tpu.memory_space<vmem>>
      %97 = tpu.memref_squeeze %96 : memref<1x1x256xf32, #tpu.memory_space<vmem>> -> memref<1x256xf32, #tpu.memory_space<vmem>>
      %98 = tpu.memref_slice %arg11[%80] : memref<2x!tpu.dma_semaphore, #tpu.memory_space<semaphore_mem>> -> memref<1x!tpu.dma_semaphore, #tpu.memory_space<semaphore_mem>>
      %99 = tpu.memref_squeeze %98 : memref<1x!tpu.dma_semaphore, #tpu.memory_space<semaphore_mem>> -> memref<!tpu.dma_semaphore, #tpu.memory_space<semaphore_mem>>
      tpu.enqueue_dma source(%95 : memref<1x256xf32, #tpu.memory_space<any>>) target(%97 : memref<1x256xf32, #tpu.memory_space<vmem>>) target_semaphore(%99 : memref<!tpu.dma_semaphore, #tpu.memory_space<semaphore_mem>>)
      %c2_i32_47 = arith.constant 2 : i32
      %100 = arith.addi %83, %c2_i32_47 : i32
      %101 = arith.index_cast %100 : i32 to index
      %102 = memref.load %arg2[%101] : memref<32xi32, #tpu.memory_space<smem>>
      %c0_i32_48 = arith.constant 0 : i32
      %103 = tpu.memref_slice %arg3[%102, %c0_i32_48] : memref<1000x256xf32, #tpu.memory_space<any>> -> memref<1x256xf32, #tpu.memory_space<any>>
      %c0_i32_49 = arith.constant 0 : i32
      %104 = tpu.memref_slice %arg10[%80, %c2_i32_47, %c0_i32_49] : memref<2x8x256xf32, #tpu.memory_space<vmem>> -> memref<1x1x256xf32, #tpu.memory_space<vmem>>
      %105 = tpu.memref_squeeze %104 : memref<1x1x256xf32, #tpu.memory_space<vmem>> -> memref<1x256xf32, #tpu.memory_space<vmem>>
      %106 = tpu.memref_slice %arg11[%80] : memref<2x!tpu.dma_semaphore, #tpu.memory_space<semaphore_mem>> -> memref<1x!tpu.dma_semaphore, #tpu.memory_space<semaphore_mem>>
      %107 = tpu.memref_squeeze %106 : memref<1x!tpu.dma_semaphore, #tpu.memory_space<semaphore_mem>> -> memref<!tpu.dma_semaphore, #tpu.memory_space<semaphore_mem>>
      tpu.enqueue_dma source(%103 : memref<1x256xf32, #tpu.memory_space<any>>) target(%105 : memref<1x256xf32, #tpu.memory_space<vmem>>) target_semaphore(%107 : memref<!tpu.dma_semaphore, #tpu.memory_space<semaphore_mem>>)
      %c3_i32 = arith.constant 3 : i32
      %108 = arith.addi %83, %c3_i32 : i32
      %109 = arith.index_cast %108 : i32 to index
      %110 = memref.load %arg2[%109] : memref<32xi32, #tpu.memory_space<smem>>
      %c0_i32_50 = arith.constant 0 : i32
      %111 = tpu.memref_slice %arg3[%110, %c0_i32_50] : memref<1000x256xf32, #tpu.memory_space<any>> -> memref<1x256xf32, #tpu.memory_space<any>>
      %c0_i32_51 = arith.constant 0 : i32
      %112 = tpu.memref_slice %arg10[%80, %c3_i32, %c0_i32_51] : memref<2x8x256xf32, #tpu.memory_space<vmem>> -> memref<1x1x256xf32, #tpu.memory_space<vmem>>
      %113 = tpu.memref_squeeze %112 : memref<1x1x256xf32, #tpu.memory_space<vmem>> -> memref<1x256xf32, #tpu.memory_space<vmem>>
      %114 = tpu.memref_slice %arg11[%80] : memref<2x!tpu.dma_semaphore, #tpu.memory_space<semaphore_mem>> -> memref<1x!tpu.dma_semaphore, #tpu.memory_space<semaphore_mem>>
      %115 = tpu.memref_squeeze %114 : memref<1x!tpu.dma_semaphore, #tpu.memory_space<semaphore_mem>> -> memref<!tpu.dma_semaphore, #tpu.memory_space<semaphore_mem>>
      tpu.enqueue_dma source(%111 : memref<1x256xf32, #tpu.memory_space<any>>) target(%113 : memref<1x256xf32, #tpu.memory_space<vmem>>) target_semaphore(%115 : memref<!tpu.dma_semaphore, #tpu.memory_space<semaphore_mem>>)
      %c4_i32 = arith.constant 4 : i32
      %116 = arith.addi %83, %c4_i32 : i32
      %117 = arith.index_cast %116 : i32 to index
      %118 = memref.load %arg2[%117] : memref<32xi32, #tpu.memory_space<smem>>
      %c0_i32_52 = arith.constant 0 : i32
      %119 = tpu.memref_slice %arg3[%118, %c0_i32_52] : memref<1000x256xf32, #tpu.memory_space<any>> -> memref<1x256xf32, #tpu.memory_space<any>>
      %c0_i32_53 = arith.constant 0 : i32
      %120 = tpu.memref_slice %arg10[%80, %c4_i32, %c0_i32_53] : memref<2x8x256xf32, #tpu.memory_space<vmem>> -> memref<1x1x256xf32, #tpu.memory_space<vmem>>
      %121 = tpu.memref_squeeze %120 : memref<1x1x256xf32, #tpu.memory_space<vmem>> -> memref<1x256xf32, #tpu.memory_space<vmem>>
      %122 = tpu.memref_slice %arg11[%80] : memref<2x!tpu.dma_semaphore, #tpu.memory_space<semaphore_mem>> -> memref<1x!tpu.dma_semaphore, #tpu.memory_space<semaphore_mem>>
      %123 = tpu.memref_squeeze %122 : memref<1x!tpu.dma_semaphore, #tpu.memory_space<semaphore_mem>> -> memref<!tpu.dma_semaphore, #tpu.memory_space<semaphore_mem>>
      tpu.enqueue_dma source(%119 : memref<1x256xf32, #tpu.memory_space<any>>) target(%121 : memref<1x256xf32, #tpu.memory_space<vmem>>) target_semaphore(%123 : memref<!tpu.dma_semaphore, #tpu.memory_space<semaphore_mem>>)
      %c5_i32 = arith.constant 5 : i32
      %124 = arith.addi %83, %c5_i32 : i32
      %125 = arith.index_cast %124 : i32 to index
      %126 = memref.load %arg2[%125] : memref<32xi32, #tpu.memory_space<smem>>
      %c0_i32_54 = arith.constant 0 : i32
      %127 = tpu.memref_slice %arg3[%126, %c0_i32_54] : memref<1000x256xf32, #tpu.memory_space<any>> -> memref<1x256xf32, #tpu.memory_space<any>>
      %c0_i32_55 = arith.constant 0 : i32
      %128 = tpu.memref_slice %arg10[%80, %c5_i32, %c0_i32_55] : memref<2x8x256xf32, #tpu.memory_space<vmem>> -> memref<1x1x256xf32, #tpu.memory_space<vmem>>
      %129 = tpu.memref_squeeze %128 : memref<1x1x256xf32, #tpu.memory_space<vmem>> -> memref<1x256xf32, #tpu.memory_space<vmem>>
      %130 = tpu.memref_slice %arg11[%80] : memref<2x!tpu.dma_semaphore, #tpu.memory_space<semaphore_mem>> -> memref<1x!tpu.dma_semaphore, #tpu.memory_space<semaphore_mem>>
      %131 = tpu.memref_squeeze %130 : memref<1x!tpu.dma_semaphore, #tpu.memory_space<semaphore_mem>> -> memref<!tpu.dma_semaphore, #tpu.memory_space<semaphore_mem>>
      tpu.enqueue_dma source(%127 : memref<1x256xf32, #tpu.memory_space<any>>) target(%129 : memref<1x256xf32, #tpu.memory_space<vmem>>) target_semaphore(%131 : memref<!tpu.dma_semaphore, #tpu.memory_space<semaphore_mem>>)
      %c6_i32 = arith.constant 6 : i32
      %132 = arith.addi %83, %c6_i32 : i32
      %133 = arith.index_cast %132 : i32 to index
      %134 = memref.load %arg2[%133] : memref<32xi32, #tpu.memory_space<smem>>
      %c0_i32_56 = arith.constant 0 : i32
      %135 = tpu.memref_slice %arg3[%134, %c0_i32_56] : memref<1000x256xf32, #tpu.memory_space<any>> -> memref<1x256xf32, #tpu.memory_space<any>>
      %c0_i32_57 = arith.constant 0 : i32
      %136 = tpu.memref_slice %arg10[%80, %c6_i32, %c0_i32_57] : memref<2x8x256xf32, #tpu.memory_space<vmem>> -> memref<1x1x256xf32, #tpu.memory_space<vmem>>
      %137 = tpu.memref_squeeze %136 : memref<1x1x256xf32, #tpu.memory_space<vmem>> -> memref<1x256xf32, #tpu.memory_space<vmem>>
      %138 = tpu.memref_slice %arg11[%80] : memref<2x!tpu.dma_semaphore, #tpu.memory_space<semaphore_mem>> -> memref<1x!tpu.dma_semaphore, #tpu.memory_space<semaphore_mem>>
      %139 = tpu.memref_squeeze %138 : memref<1x!tpu.dma_semaphore, #tpu.memory_space<semaphore_mem>> -> memref<!tpu.dma_semaphore, #tpu.memory_space<semaphore_mem>>
      tpu.enqueue_dma source(%135 : memref<1x256xf32, #tpu.memory_space<any>>) target(%137 : memref<1x256xf32, #tpu.memory_space<vmem>>) target_semaphore(%139 : memref<!tpu.dma_semaphore, #tpu.memory_space<semaphore_mem>>)
      %c7_i32 = arith.constant 7 : i32
      %140 = arith.addi %83, %c7_i32 : i32
      %141 = arith.index_cast %140 : i32 to index
      %142 = memref.load %arg2[%141] : memref<32xi32, #tpu.memory_space<smem>>
      %c0_i32_58 = arith.constant 0 : i32
      %143 = tpu.memref_slice %arg3[%142, %c0_i32_58] : memref<1000x256xf32, #tpu.memory_space<any>> -> memref<1x256xf32, #tpu.memory_space<any>>
      %c0_i32_59 = arith.constant 0 : i32
      %144 = tpu.memref_slice %arg10[%80, %c7_i32, %c0_i32_59] : memref<2x8x256xf32, #tpu.memory_space<vmem>> -> memref<1x1x256xf32, #tpu.memory_space<vmem>>
      %145 = tpu.memref_squeeze %144 : memref<1x1x256xf32, #tpu.memory_space<vmem>> -> memref<1x256xf32, #tpu.memory_space<vmem>>
      %146 = tpu.memref_slice %arg11[%80] : memref<2x!tpu.dma_semaphore, #tpu.memory_space<semaphore_mem>> -> memref<1x!tpu.dma_semaphore, #tpu.memory_space<semaphore_mem>>
      %147 = tpu.memref_squeeze %146 : memref<1x!tpu.dma_semaphore, #tpu.memory_space<semaphore_mem>> -> memref<!tpu.dma_semaphore, #tpu.memory_space<semaphore_mem>>
      tpu.enqueue_dma source(%143 : memref<1x256xf32, #tpu.memory_space<any>>) target(%145 : memref<1x256xf32, #tpu.memory_space<vmem>>) target_semaphore(%147 : memref<!tpu.dma_semaphore, #tpu.memory_space<semaphore_mem>>)
      %c8_i32_60 = arith.constant 8 : i32
    } else {
    }
    %c0_i32_8 = arith.constant 0 : i32
    %c0_i32_9 = arith.constant 0 : i32
    %17 = tpu.memref_slice %arg3[%c0_i32_8, %c0_i32_9] : memref<1000x256xf32, #tpu.memory_space<any>> -> memref<8x256xf32, #tpu.memory_space<any>>
    %c0_i32_10 = arith.constant 0 : i32
    %c0_i32_11 = arith.constant 0 : i32
    %18 = tpu.memref_slice %arg10[%9, %c0_i32_10, %c0_i32_11] : memref<2x8x256xf32, #tpu.memory_space<vmem>> -> memref<1x8x256xf32, #tpu.memory_space<vmem>>
    %19 = tpu.memref_squeeze %18 : memref<1x8x256xf32, #tpu.memory_space<vmem>> -> memref<8x256xf32, #tpu.memory_space<vmem>>
    %20 = tpu.memref_slice %arg11[%9] : memref<2x!tpu.dma_semaphore, #tpu.memory_space<semaphore_mem>> -> memref<1x!tpu.dma_semaphore, #tpu.memory_space<semaphore_mem>>
    %21 = tpu.memref_squeeze %20 : memref<1x!tpu.dma_semaphore, #tpu.memory_space<semaphore_mem>> -> memref<!tpu.dma_semaphore, #tpu.memory_space<semaphore_mem>>
    tpu.wait_dma2 semaphore(%21 : memref<!tpu.dma_semaphore, #tpu.memory_space<semaphore_mem>>) src(%17 : memref<8x256xf32, #tpu.memory_space<any>>) dst(%19 : memref<8x256xf32, #tpu.memory_space<vmem>>)
    %c8_i32 = arith.constant 8 : i32
    %22 = arith.muli %arg1, %c8_i32 : i32
    %23 = tpu.assume_multiple %22, 8 : i32
    %24 = arith.index_cast %9 : i32 to index
    %c0 = arith.constant 0 : index
    %c0_12 = arith.constant 0 : index
    %25 = vector.load %arg10[%24, %c0, %c0_12] : memref<2x8x256xf32, #tpu.memory_space<vmem>>, vector<1x8x256xf32>
    %26 = vector.shape_cast %25 : vector<1x8x256xf32> to vector<8x256xf32>
    %27 = arith.index_cast %23 : i32 to index
    %c0_13 = arith.constant 0 : index
    %28 = vector.load %arg4[%27, %c0_13] : memref<16x256xf32, #tpu.memory_space<vmem>>, vector<8x256xf32>
    %29 = arith.addf %26, %28 : vector<8x256xf32>
    %c0_14 = arith.constant 0 : index
    %c0_15 = arith.constant 0 : index
    %c0_16 = arith.constant 0 : index
    %30 = vector.load %arg6[%c0_14, %c0_15, %c0_16] : memref<1x8x1xi32, #tpu.memory_space<vmem>>, vector<1x8x1xi32>
    %31 = vector.shape_cast %30 : vector<1x8x1xi32> to vector<8x1xi32>
    %c0_i32_17 = arith.constant 0 : i32
    %32 = vector.broadcast %c0_i32_17 : i32 to vector<8x1xi32>
    %33 = arith.cmpi eq, %31, %32 : vector<8x1xi32>
    %c0_18 = arith.constant 0 : index
    %c0_19 = arith.constant 0 : index
    %34 = vector.load %arg5[%c0_18, %c0_19] : memref<2x256xf32, #tpu.memory_space<vmem>>, vector<1x256xf32>
    %c1 = arith.constant 1 : index
    %c0_20 = arith.constant 0 : index
    %35 = vector.load %arg5[%c1, %c0_20] : memref<2x256xf32, #tpu.memory_space<vmem>>, vector<1x256xf32>
    %36 = vector.shape_cast %33 : vector<8x1xi1> to vector<8x1xi1>
    %37 = vector.broadcast %36 : vector<8x1xi1> to vector<8x256xi1>
    %38 = vector.shape_cast %34 : vector<1x256xf32> to vector<1x256xf32>
    %39 = vector.broadcast %38 : vector<1x256xf32> to vector<8x256xf32>
    %40 = vector.shape_cast %35 : vector<1x256xf32> to vector<1x256xf32>
    %41 = vector.broadcast %40 : vector<1x256xf32> to vector<8x256xf32>
    %42 = arith.select %37, %39, %41 : vector<8x256xi1>, vector<8x256xf32>
    %43 = arith.addf %29, %42 : vector<8x256xf32>
    %cst = arith.constant dense<0.000000e+00> : vector<8xf32>
    %44 = vector.multi_reduction <add>, %43, %cst [1] : vector<8x256xf32> to vector<8xf32>
    %45 = vector.shape_cast %44 : vector<8xf32> to vector<8x1xf32>
    %cst_21 = arith.constant 2.560000e+02 : f32
    %46 = vector.broadcast %cst_21 : f32 to vector<8x1xf32>
    %47 = arith.divf %45, %46 : vector<8x1xf32>
    %48 = vector.broadcast %47 : vector<8x1xf32> to vector<8x256xf32>
    %49 = arith.subf %43, %48 : vector<8x256xf32>
    %50 = arith.mulf %49, %49 : vector<8x256xf32>
    %cst_22 = arith.constant dense<0.000000e+00> : vector<8xf32>
    %51 = vector.multi_reduction <add>, %50, %cst_22 [1] : vector<8x256xf32> to vector<8xf32>
    %52 = vector.shape_cast %51 : vector<8xf32> to vector<8x1xf32>
    %cst_23 = arith.constant 2.560000e+02 : f32
    %53 = vector.broadcast %cst_23 : f32 to vector<8x1xf32>
    %54 = arith.divf %52, %53 : vector<8x1xf32>
    %cst_24 = arith.constant 9.99999996E-13 : f32
    %55 = vector.broadcast %cst_24 : f32 to vector<8x1xf32>
    %56 = arith.addf %54, %55 : vector<8x1xf32>
    %57 = math.rsqrt %56 : vector<8x1xf32>
    %58 = vector.broadcast %57 : vector<8x1xf32> to vector<8x256xf32>
    %59 = arith.mulf %49, %58 : vector<8x256xf32>
    %c0_25 = arith.constant 0 : index
    %c0_26 = arith.constant 0 : index
    %60 = vector.load %arg7[%c0_25, %c0_26] : memref<1x256xf32, #tpu.memory_space<vmem>>, vector<1x256xf32>
    %61 = vector.broadcast %60 : vector<1x256xf32> to vector<8x256xf32>
    %62 = arith.mulf %59, %61 : vector<8x256xf32>
    %c0_27 = arith.constant 0 : index
    %c0_28 = arith.constant 0 : index
    %63 = vector.load %arg8[%c0_27, %c0_28] : memref<1x256xf32, #tpu.memory_space<vmem>>, vector<1x256xf32>
    %64 = vector.broadcast %63 : vector<1x256xf32> to vector<8x256xf32>
    %65 = arith.addf %62, %64 : vector<8x256xf32>
    %c0_29 = arith.constant 0 : index
    %c0_30 = arith.constant 0 : index
    %c0_31 = arith.constant 0 : index
    %66 = vector.load %arg9[%c0_29, %c0_30, %c0_31] : memref<1x8x256xf32, #tpu.memory_space<vmem>>, vector<1x8x256xf32>
    %67 = vector.shape_cast %66 : vector<1x8x256xf32> to vector<8x256xf32>
    %68 = vector.shape_cast %65 : vector<8x256xf32> to vector<1x8x256xf32>
    tpu.vector_store %arg9[%c0_29, %c0_30, %c0_31], %68 {strides = array<i32>} : memref<1x8x256xf32, #tpu.memory_space<vmem>>, vector<1x8x256xf32>,
    return
  }
  func.func @transform_1(%arg0: i32, %arg1: i32, %arg2: memref<32xi32, #tpu.memory_space<smem>>) -> (i32, i32) {
    %c0_i32 = arith.constant 0 : i32
    %c0_i32_0 = arith.constant 0 : i32
    %c0_i32_1 = arith.constant 0 : i32
    return %c0_i32, %c0_i32_0 : i32, i32
  }
  func.func @transform_2(%arg0: i32, %arg1: i32, %arg2: memref<32xi32, #tpu.memory_space<smem>>) -> (i32, i32) {
    %c0_i32 = arith.constant 0 : i32
    %c0_i32_0 = arith.constant 0 : i32
    %c0_i32_1 = arith.constant 0 : i32
    return %c0_i32, %c0_i32_0 : i32, i32
  }
  func.func @transform_3(%arg0: i32, %arg1: i32, %arg2: memref<32xi32, #tpu.memory_space<smem>>) -> (i32, i32, i32) {
    %c0_i32 = arith.constant 0 : i32
    %c0_i32_0 = arith.constant 0 : i32
    return %arg0, %arg1, %c0_i32 : i32, i32, i32
  }
  func.func @transform_4(%arg0: i32, %arg1: i32, %arg2: memref<32xi32, #tpu.memory_space<smem>>) -> (i32, i32) {
    %c0_i32 = arith.constant 0 : i32
    %c0_i32_0 = arith.constant 0 : i32
    %c0_i32_1 = arith.constant 0 : i32
    return %c0_i32, %c0_i32_0 : i32, i32
  }
  func.func @transform_5(%arg0: i32, %arg1: i32, %arg2: memref<32xi32, #tpu.memory_space<smem>>) -> (i32, i32) {
    %c0_i32 = arith.constant 0 : i32
    %c0_i32_0 = arith.constant 0 : i32
    %c0_i32_1 = arith.constant 0 : i32
    return %c0_i32, %c0_i32_0 : i32, i32
  }
  func.func @transform_6(%arg0: i32, %arg1: i32, %arg2: memref<32xi32, #tpu.memory_space<smem>>) -> (i32, i32, i32) {
    %c0_i32 = arith.constant 0 : i32
    %c0_i32_0 = arith.constant 0 : i32
    return %arg0, %arg1, %c0_i32 : i32, i32, i32
  }
}

</mosaic_0001>

<llo_original>
// kernel: tpu_custom_call.1
$region0: #{tpu_custom_call.1}
  #allocation0 [shape = 'u32[]', space=smem, size = 0x4, offset = 0x4, fixed_abs, tag = 'smem constant byte address 0x4 - core index']
  #allocation1 [shape = 'u32[144,128]{1,0:T(1,128)}', space=vmem, size = 0x12000, scoped, tag = 'internal scratch']
  #allocation2 [shape = 'f32[2,8,256]{2,1,0:T(8,128)}', space=vmem, size = 0x4000, scoped, tag = 'scratch operand']
  #allocation3 [shape = 's32[2]{0}', space=sflag, size = 0x8, scoped, tag = 'scratch operand']
  #allocation4 [shape = 's32[1]{0}', space=sflag, size = 0x4, scoped, tag = 'scoped memory for tpu_custom_call.1']
  #allocation5 [shape = 'u8[512]{0}', space=smem, size = 0x200, scoped, tag = 'prefetched SMEM operand 0']
  #allocation8 [shape = 's32[]', space=sflag, size = 0x4, offset = 0, fixed_abs, tag = 'sflag constant byte address 0x0 - dummy sync flag']
  #allocation9 [shape = 's32[]', space=sflag, size = 0x4, offset = 0, fixed_abs, tag = 'sflag constant byte address 0x0 - dummy sync flag']
  #allocation10 [shape = 's32[]', space=sflag, size = 0x4, offset = 0, fixed_abs, tag = 'sflag constant byte address 0x0 - dummy sync flag']
  #allocation11 [shape = 's32[]', space=sflag, size = 0x4, offset = 0, fixed_abs, tag = 'sflag constant byte address 0x0 - dummy sync flag']
  #allocation12 [shape = 's32[]', space=sflag, size = 0x4, offset = 0, fixed_abs, tag = 'sflag constant byte address 0x0 - dummy sync flag']
  #allocation13 [shape = 's32[]', space=sflag, size = 0x4, offset = 0, fixed_abs, tag = 'sflag constant byte address 0x0 - dummy sync flag']
  #allocation14 [shape = 's32[]', space=sflag, size = 0x4, offset = 0, fixed_abs, tag = 'sflag constant byte address 0x0 - dummy sync flag']
  #allocation15 [shape = 's32[]', space=sflag, size = 0x4, offset = 0, fixed_abs, tag = 'sflag constant byte address 0x0 - dummy sync flag']
  #allocation16 [shape = 's32[]', space=sflag, size = 0x4, offset = 0, fixed_abs, tag = 'sflag constant byte address 0x0 - dummy sync flag']
  #allocation17 [shape = 's32[]', space=sflag, size = 0x4, offset = 0, fixed_abs, tag = 'sflag constant byte address 0x0 - dummy sync flag']
  #allocation18 [shape = 's32[]', space=sflag, size = 0x4, offset = 0, fixed_abs, tag = 'sflag constant byte address 0x0 - dummy sync flag']
  #allocation19 [shape = 's32[]', space=sflag, size = 0x4, offset = 0, fixed_abs, tag = 'sflag constant byte address 0x0 - dummy sync flag']
  #allocation20 [shape = 's32[]', space=sflag, size = 0x4, offset = 0, fixed_abs, tag = 'sflag constant byte address 0x0 - dummy sync flag']
  #allocation21 [shape = 's32[]', space=sflag, size = 0x4, offset = 0, fixed_abs, tag = 'sflag constant byte address 0x0 - dummy sync flag']
  #allocation22 [shape = 's32[]', space=sflag, size = 0x4, offset = 0, fixed_abs, tag = 'sflag constant byte address 0x0 - dummy sync flag']
  #allocation23 [shape = 's32[]', space=sflag, size = 0x4, offset = 0, fixed_abs, tag = 'sflag constant byte address 0x0 - dummy sync flag']
  %s0 = inlined_call_operand.vmem [shape: s32[32], index: 0, kind: input, shape index: {}]
  %s1 = inlined_call_operand.hbm [shape: f32[1000,256], index: 1, kind: input, shape index: {}]
  %s2 = inlined_call_operand.vmem [shape: f32[16,256], index: 2, kind: input, shape index: {}]
  %s3 = inlined_call_operand.vmem [shape: f32[2,256], index: 3, kind: input, shape index: {}]
  %s4 = inlined_call_operand.vmem [shape: s32[2,16,1], index: 4, kind: input, shape index: {}]
  %s5 = inlined_call_operand.vmem [shape: f32[1,256], index: 5, kind: input, shape index: {}]
  %s6 = inlined_call_operand.vmem [shape: f32[1,256], index: 6, kind: input, shape index: {}]
  %s7 = inlined_call_operand.hbm [shape: f32[2,16,256], index: 7, kind: output, shape index: {}]
  %s8 = sld [smem:[#allocation0]]
  $region61: #{tpu_custom_call.1} parent=0
    _
  %s10 = ssub.s32 1, %s8
  %s11 = scalar_select 0, %s10, %s8
  %s12 = sshll.u32 %s0, 4
  %s13 = int_to_ptr.vmem [resolvable:$true] %s12
  %15 = dma.vmem_to_smem %s13, 16, [#allocation5], [#allocation4]
  %16 = dma.done [#allocation4], 16
  %17 = sfence
  $region1: #{tpu_custom_call.1} parent=0
    #allocation6 [shape = 'u8[16384]{0}', space=vmem, size = 0x4000, scoped, tag = 'output window, operand 0']
    #allocation7 [shape = 's32[2]{0}', space=sflag, size = 0x8, scoped, tag = 'scoped memory for tpu_custom_call.1']
    %18 = vsyncpa [#allocation7], 0
    %s19 = scalar_lea.sflag [#allocation7], 1
    %20 = vsyncpa %s19, 0
    loop: start=0, step=1, limit=6
    $region2: #{tpu_custom_call.1} parent=1 // loop_pre_header
      _
    $region3: #{tpu_custom_call.1} parent=1 // loop_header
      %s22 = sphi 0, %s26
      %p23 = scmp.ge.s32.totalorder %s22, 6
      %s29 = sphi 0, %s41
      %s30 = sphi 0, %s37
      %s31 = sphi 0, %s29
      %s32 = sphi 0, %s30
      %s33 = sphi 0, %s31
      %s34 = sphi 0, %s32
      %s42 = sphi 0, %s42
      %s44 = sphi 0, %s42
      %s45 = sphi 0, %s44
      %s59 = sphi 0, %s45
      %s63 = sphi 0, %s63
      %s65 = sphi 0, %s63
      %s66 = sphi 0, %s65
      %s80 = sphi 0, %s66
      %s88 = sphi 0, %s90
      %s91 = sphi 0, %s88
      %s92 = sphi 0, %s91
      %s108 = sphi 0, %s92
      %s112 = sphi 0, %s112
      %s114 = sphi 0, %s112
      %s115 = sphi 0, %s114
      %s129 = sphi 0, %s115
      %s133 = sphi 0, %s133
      %s135 = sphi 0, %s133
      %s136 = sphi 0, %s135
      %s150 = sphi 0, %s136
      %s158 = sphi 0, %s160
      %s161 = sphi 0, %s158
      %s162 = sphi 0, %s161
      %s178 = sphi 0, %s162
    $region4: #{tpu_custom_call.1} parent=1 // loop_header_branch
      %25 = sbr.rel (%p23) target = $region8
    $region5: #{tpu_custom_call.1} parent=1 // loop_body
      %s27 = ssub.s32 %s22, 1
      %s28 = ssub.s32 %s22, 2
      %s35 = sadd.s32 1, %s30
      %p36 = scmp.ge.s32.totalorder %s35, 2
      %s37 = scalar_select %p36, 0, %s35
      %s38 = sadd.s32 1, %s29
      %s39 = scalar_select %p36, %s38, %s29
      %p40 = scmp.ge.s32.totalorder %s39, 2
      %s41 = scalar_select %p40, 0, %s39
      %s43 = sadd.s32 %s42, 1
      %p46 = scmp.eq.s32.totalorder %s22, 3
      %p47 = scmp.ne.s32.totalorder %s42, %s44
      %p48 = scmp.eq.s32.totalorder %s22, 0
      %p49 = por %p47, %p48
      %p50 = scmp.ne.s32.totalorder %s42, %s44
      %p51 = scmp.eq.s32.totalorder %s27, 3
      %p52 = por %p50, %p51
      %p53 = scmp.ne.s32.totalorder %s44, %s45
      %p54 = scmp.eq.s32.totalorder %s27, 0
      %p55 = por %p53, %p54
      %p56 = scmp.ne.s32.totalorder %s44, %s45
      %p57 = scmp.eq.s32.totalorder %s28, 3
      %p58 = por %p56, %p57
      %p60 = scmp.ne.s32.totalorder %s45, %s59
      %p61 = scmp.eq.s32.totalorder %s28, 0
      %p62 = por %p60, %p61
      %s64 = sadd.s32 %s63, 1
      %p67 = scmp.eq.s32.totalorder %s22, 3
      %p68 = scmp.ne.s32.totalorder %s63, %s65
      %p69 = scmp.eq.s32.totalorder %s22, 0
      %p70 = por %p68, %p69
      %p71 = scmp.ne.s32.totalorder %s63, %s65
      %p72 = scmp.eq.s32.totalorder %s27, 3
      %p73 = por %p71, %p72
      %p74 = scmp.ne.s32.totalorder %s65, %s66
      %p75 = scmp.eq.s32.totalorder %s27, 0
      %p76 = por %p74, %p75
      %p77 = scmp.ne.s32.totalorder %s65, %s66
      %p78 = scmp.eq.s32.totalorder %s28, 3
      %p79 = por %p77, %p78
      %p81 = scmp.ne.s32.totalorder %s66, %s80
      %p82 = scmp.eq.s32.totalorder %s28, 0
      %p83 = por %p81, %p82
      %s84 = ssub.s32 %s29, %s41
      %s85 = ssub.s32 %s30, %s37
      %s86 = sor.u32 %s84, %s85
      %p87 = scmp.eq.s32.totalorder %s86, 0
      %s89 = sadd.s32 %s88, 1
      %s90 = scalar_select %p87, %s88, %s89
      %p93 = pneg %p87
      %p94 = scmp.eq.s32.totalorder %s22, 3
      %p95 = por %p93, %p94
      %p96 = scmp.ne.s32.totalorder %s88, %s91
      %p97 = scmp.eq.s32.totalorder %s22, 0
      %p98 = por %p96, %p97
      %p99 = scmp.ne.s32.totalorder %s88, %s91
      %p100 = scmp.eq.s32.totalorder %s27, 3
      %p101 = por %p99, %p100
      %p102 = scmp.ne.s32.totalorder %s91, %s92
      %p103 = scmp.eq.s32.totalorder %s27, 0
      %p104 = por %p102, %p103
      %p105 = scmp.ne.s32.totalorder %s91, %s92
      %p106 = scmp.eq.s32.totalorder %s28, 3
      %p107 = por %p105, %p106
      %p109 = scmp.ne.s32.totalorder %s92, %s108
      %p110 = scmp.eq.s32.totalorder %s28, 0
      %p111 = por %p109, %p110
      %s113 = sadd.s32 %s112, 1
      %p116 = scmp.eq.s32.totalorder %s22, 3
      %p117 = scmp.ne.s32.totalorder %s112, %s114
      %p118 = scmp.eq.s32.totalorder %s22, 0
      %p119 = por %p117, %p118
      %p120 = scmp.ne.s32.totalorder %s112, %s114
      %p121 = scmp.eq.s32.totalorder %s27, 3
      %p122 = por %p120, %p121
      %p123 = scmp.ne.s32.totalorder %s114, %s115
      %p124 = scmp.eq.s32.totalorder %s27, 0
      %p125 = por %p123, %p124
      %p126 = scmp.ne.s32.totalorder %s114, %s115
      %p127 = scmp.eq.s32.totalorder %s28, 3
      %p128 = por %p126, %p127
      %p130 = scmp.ne.s32.totalorder %s115, %s129
      %p131 = scmp.eq.s32.totalorder %s28, 0
      %p132 = por %p130, %p131
      %s134 = sadd.s32 %s133, 1
      %p137 = scmp.eq.s32.totalorder %s22, 3
      %p138 = scmp.ne.s32.totalorder %s133, %s135
      %p139 = scmp.eq.s32.totalorder %s22, 0
      %p140 = por %p138, %p139
      %p141 = scmp.ne.s32.totalorder %s133, %s135
      %p142 = scmp.eq.s32.totalorder %s27, 3
      %p143 = por %p141, %p142
      %p144 = scmp.ne.s32.totalorder %s135, %s136
      %p145 = scmp.eq.s32.totalorder %s27, 0
      %p146 = por %p144, %p145
      %p147 = scmp.ne.s32.totalorder %s135, %s136
      %p148 = scmp.eq.s32.totalorder %s28, 3
      %p149 = por %p147, %p148
      %p151 = scmp.ne.s32.totalorder %s136, %s150
      %p152 = scmp.eq.s32.totalorder %s28, 0
      %p153 = por %p151, %p152
      %s154 = ssub.s32 %s29, %s41
      %s155 = ssub.s32 %s30, %s37
      %s156 = sor.u32 %s154, %s155
      %p157 = scmp.eq.s32.totalorder %s156, 0
      %s159 = sadd.s32 %s158, 1
      %s160 = scalar_select %p157, %s158, %s159
      %p163 = pneg %p157
      %p164 = scmp.eq.s32.totalorder %s22, 3
      %p165 = por %p163, %p164
      %p166 = scmp.ne.s32.totalorder %s158, %s161
      %p167 = scmp.eq.s32.totalorder %s22, 0
      %p168 = por %p166, %p167
      %p169 = scmp.ne.s32.totalorder %s158, %s161
      %p170 = scmp.eq.s32.totalorder %s27, 3
      %p171 = por %p169, %p170
      %p172 = scmp.ne.s32.totalorder %s161, %s162
      %p173 = scmp.eq.s32.totalorder %s27, 0
      %p174 = por %p172, %p173
      %p175 = scmp.ne.s32.totalorder %s161, %s162
      %p176 = scmp.eq.s32.totalorder %s28, 3
      %p177 = por %p175, %p176
      %p179 = scmp.ne.s32.totalorder %s162, %s178
      %p180 = scmp.eq.s32.totalorder %s28, 0
      %p181 = por %p179, %p180
      %p182 = scmp.le.s32.totalorder 1, %s22
      %p183 = scmp.lt.s32.totalorder %s22, 5
      %p184 = pnand %p182, %p183
      %p185 = pneg %p184
      // Predicated region
      $region9: #{tpu_custom_call.1} parent=5 // pred_check
        _
      $region10: #{tpu_custom_call.1} parent=5 // pred_check_branch
        %187 = sbr.rel (%p184) target = $region12
      $region11: #{tpu_custom_call.1} parent=5 // pred_region
        %s188 = ssub.s32 %s22, 1
        // Predicated region
        $region13: #{tpu_custom_call.1} parent=11 // pred_check
          %p189 = pneg %p55
        $region14: #{tpu_custom_call.1} parent=11 // pred_check_branch
          %191 = sbr.rel (%p189) target = $region16
        $region15: #{tpu_custom_call.1} parent=11 // pred_region
          _
        $region16: #{tpu_custom_call.1} parent=11 // pred_fallthru
          _
        // Predicated region
        $region17: #{tpu_custom_call.1} parent=11 // pred_check
          %p192 = pneg %p76
        $region18: #{tpu_custom_call.1} parent=11 // pred_check_branch
          %194 = sbr.rel (%p192) target = $region20
        $region19: #{tpu_custom_call.1} parent=11 // pred_region
          _
        $region20: #{tpu_custom_call.1} parent=11 // pred_fallthru
          _
        // Predicated region
        $region21: #{tpu_custom_call.1} parent=11 // pred_check
          %p195 = pneg %p125
        $region22: #{tpu_custom_call.1} parent=11 // pred_check_branch
          %197 = sbr.rel (%p195) target = $region24
        $region23: #{tpu_custom_call.1} parent=11 // pred_region
          _
        $region24: #{tpu_custom_call.1} parent=11 // pred_fallthru
          _
        // Predicated region
        $region25: #{tpu_custom_call.1} parent=11 // pred_check
          %p198 = pneg %p146
        $region26: #{tpu_custom_call.1} parent=11 // pred_check_branch
          %200 = sbr.rel (%p198) target = $region28
        $region27: #{tpu_custom_call.1} parent=11 // pred_region
          _
        $region28: #{tpu_custom_call.1} parent=11 // pred_fallthru
          _
      $region12: #{tpu_custom_call.1} parent=5 // pred_fallthru
        _
      %p201 = scmp.lt.s32.totalorder %s22, 4
      // Predicated region
      $region29: #{tpu_custom_call.1} parent=5 // pred_check
        %p202 = pneg %p201
      $region30: #{tpu_custom_call.1} parent=5 // pred_check_branch
        %204 = sbr.rel (%p202) target = $region32
      $region31: #{tpu_custom_call.1} parent=5 // pred_region
        // Predicated region
        $region33: #{tpu_custom_call.1} parent=31 // pred_check
          %p205 = pneg %p98
        $region34: #{tpu_custom_call.1} parent=31 // pred_check_branch
          %207 = sbr.rel (%p205) target = $region36
        $region35: #{tpu_custom_call.1} parent=31 // pred_region
          %p208 = scmp.lt.s32.totalorder %s29, 1
          %s209 = scalar_select %p208, %s29, 1
          %p210 = scmp.lt.s32.totalorder %s30, 1
          %s211 = scalar_select %p210, %s30, 1
          %s212 = smul.addr %s209, 2
          %s213 = sadd.s32 %s211, %s212
          %s214 = smul.addr %s213, 8
          %s215 = scalar_lea.vmem %s4, %s214
        $region36: #{tpu_custom_call.1} parent=31 // pred_fallthru
          _
      $region32: #{tpu_custom_call.1} parent=5 // pred_fallthru
        _
      %p216 = scmp.le.s32.totalorder 1, %s22
      %p217 = scmp.lt.s32.totalorder %s22, 5
      %p218 = pnand %p216, %p217
      %p219 = pneg %p218
      // Predicated region
      $region37: #{tpu_custom_call.1} parent=5 // pred_check
        _
      $region38: #{tpu_custom_call.1} parent=5 // pred_check_branch
        %221 = sbr.rel (%p218) target = $region40
      $region39: #{tpu_custom_call.1} parent=5 // pred_region
        %s222 = ssub.s32 %s22, 1
        %p223 = pneg %p55
        %p224 = pneg %p52
        %p225 = pneg %p76
        %p226 = pneg %p73
        %p227 = scmp.lt.s32.totalorder %s31, 1
        %s228 = scalar_select %p227, %s31, 1
        %p229 = scmp.lt.s32.totalorder %s32, 1
        %s230 = scalar_select %p229, %s32, 1
        %s231 = smul.addr %s228, 2
        %s232 = sadd.s32 %s230, %s231
        %s233 = smul.addr %s232, 8
        %s234 = scalar_lea.vmem %s4, %s233
        %p235 = pneg %p104
        %p236 = pneg %p101
        %p237 = pneg %p125
        %p238 = pneg %p122
        %p239 = pneg %p146
        %p240 = pneg %p143
        %p241 = pneg %p174
        %p242 = pneg %p171
        %s243 = sand.u32 %s161, 1
        %s244 = scalar_lea.sflag [#allocation7], %s243
        %s245 = sand.u32 %s161, 1
        %s246 = smul.addr %s245, 16
        %s247 = scalar_lea.vmem [#allocation6], %s246
        %p248 = scmp.lt.s32.totalorder %s31, 1
        %s249 = scalar_select %p248, %s31, 1
        %p250 = scmp.lt.s32.totalorder %s32, 1
        %s251 = scalar_select %p250, %s32, 1
        %s252 = smul.addr %s249, 2
        %s253 = sadd.s32 %s251, %s252
        %s254 = smul.addr %s253, 8
        %s255 = scalar_lea.vmem %s4, %s254
        %p256 = scmp.lt.s32.totalorder %s32, 0
        %s257 = ssub.s32 0, %s32
        %s258 = scalar_select %p256, %s257, %s32
        %s259 = sand.u32 %s258, 1
        %s260 = ssub.s32 0, %s259
        %s261 = scalar_select %p256, %s260, %s259
        %p262 = scmp.ne.s32.totalorder %s261, 0
        %p263 = scmp.lt.s32.totalorder %s261, 0
        %p264 = pnand %p263, %p262
        %p265 = pneg %p264
        %s266 = sadd.s32 %s261, 2
        %s267 = scalar_select %p265, %s266, %s261
        %p268 = scmp.eq.s32.totalorder %s32, 0
        // Predicated region
        $region41: #{tpu_custom_call.1} parent=39 // pred_check
          %p269 = pneg %p268
        $region42: #{tpu_custom_call.1} parent=39 // pred_check_branch
          %271 = sbr.rel (%p269) target = $region44
        $region43: #{tpu_custom_call.1} parent=39 // pred_region
          %s272 = smul.u32 %s31, 16
          %s273 = sld [smem:[#allocation5 + %s272]]
          %s274 = sshrl.u32 %s273, 3
          %s275 = sand.u32 %s273, 7
          %s276 = smul.u32 %s274, 16
          %s277 = sadd.s32 %s275, %s276
          %s278 = smul.addr %s277, 16
          %s279 = scalar_lea.hbm %s1, %s278
          %s281 = sshll.u32 [#allocation2], 4
          %s282 = int_to_ptr.vmem [resolvable:$true] %s281
          %284 = dma.hbm_to_vmem [thread:$0]  %s279, 32, %s282, [#allocation3], 128, 128, 1
          %s285 = sadd.s32 %s272, 1
          %s286 = sld [smem:[#allocation5 + %s285]]
          %s287 = sshrl.u32 %s286, 3
          %s288 = sand.u32 %s286, 7
          %s289 = smul.u32 %s287, 16
          %s290 = sadd.s32 %s288, %s289
          %s291 = smul.addr %s290, 16
          %s292 = scalar_lea.hbm %s1, %s291
          %s293 = scalar_lea.vmem [#allocation2], 1
          %s295 = sshll.u32 %s293, 4
          %s296 = int_to_ptr.vmem [resolvable:$true] %s295
          %298 = dma.hbm_to_vmem [thread:$0]  %s292, 32, %s296, [#allocation3], 128, 128, 1
          %s299 = sadd.s32 %s272, 2
          %s300 = sld [smem:[#allocation5 + %s299]]
          %s301 = sshrl.u32 %s300, 3
          %s302 = sand.u32 %s300, 7
          %s303 = smul.u32 %s301, 16
          %s304 = sadd.s32 %s302, %s303
          %s305 = smul.addr %s304, 16
          %s306 = scalar_lea.hbm %s1, %s305
          %s307 = scalar_lea.vmem [#allocation2], 2
          %s309 = sshll.u32 %s307, 4
          %s310 = int_to_ptr.vmem [resolvable:$true] %s309
          %312 = dma.hbm_to_vmem [thread:$0]  %s306, 32, %s310, [#allocation3], 128, 128, 1
          %s313 = sadd.s32 %s272, 3
          %s314 = sld [smem:[#allocation5 + %s313]]
          %s315 = sshrl.u32 %s314, 3
          %s316 = sand.u32 %s314, 7
          %s317 = smul.u32 %s315, 16
          %s318 = sadd.s32 %s316, %s317
          %s319 = smul.addr %s318, 16
          %s320 = scalar_lea.hbm %s1, %s319
          %s321 = scalar_lea.vmem [#allocation2], 3
          %s323 = sshll.u32 %s321, 4
          %s324 = int_to_ptr.vmem [resolvable:$true] %s323
          %326 = dma.hbm_to_vmem [thread:$0]  %s320, 32, %s324, [#allocation3], 128, 128, 1
          %s327 = sadd.s32 %s272, 4
          %s328 = sld [smem:[#allocation5 + %s327]]
          %s329 = sshrl.u32 %s328, 3
          %s330 = sand.u32 %s328, 7
          %s331 = smul.u32 %s329, 16
          %s332 = sadd.s32 %s330, %s331
          %s333 = smul.addr %s332, 16
          %s334 = scalar_lea.hbm %s1, %s333
          %s335 = scalar_lea.vmem [#allocation2], 4
          %s337 = sshll.u32 %s335, 4
          %s338 = int_to_ptr.vmem [resolvable:$true] %s337
          %340 = dma.hbm_to_vmem [thread:$0]  %s334, 32, %s338, [#allocation3], 128, 128, 1
          %s341 = sadd.s32 %s272, 5
          %s342 = sld [smem:[#allocation5 + %s341]]
          %s343 = sshrl.u32 %s342, 3
          %s344 = sand.u32 %s342, 7
          %s345 = smul.u32 %s343, 16
          %s346 = sadd.s32 %s344, %s345
          %s347 = smul.addr %s346, 16
          %s348 = scalar_lea.hbm %s1, %s347
          %s349 = scalar_lea.vmem [#allocation2], 5
          %s351 = sshll.u32 %s349, 4
          %s352 = int_to_ptr.vmem [resolvable:$true] %s351
          %354 = dma.hbm_to_vmem [thread:$0]  %s348, 32, %s352, [#allocation3], 128, 128, 1
          %s355 = sadd.s32 %s272, 6
          %s356 = sld [smem:[#allocation5 + %s355]]
          %s357 = sshrl.u32 %s356, 3
          %s358 = sand.u32 %s356, 7
          %s359 = smul.u32 %s357, 16
          %s360 = sadd.s32 %s358, %s359
          %s361 = smul.addr %s360, 16
          %s362 = scalar_lea.hbm %s1, %s361
          %s363 = scalar_lea.vmem [#allocation2], 6
          %s365 = sshll.u32 %s363, 4
          %s366 = int_to_ptr.vmem [resolvable:$true] %s365
          %368 = dma.hbm_to_vmem [thread:$0]  %s362, 32, %s366, [#allocation3], 128, 128, 1
          %s369 = sadd.s32 %s272, 7
          %s370 = sld [smem:[#allocation5 + %s369]]
          %s371 = sshrl.u32 %s370, 3
          %s372 = sand.u32 %s370, 7
          %s373 = smul.u32 %s371, 16
          %s374 = sadd.s32 %s372, %s373
          %s375 = smul.addr %s374, 16
          %s376 = scalar_lea.hbm %s1, %s375
          %s377 = scalar_lea.vmem [#allocation2], 7
          %s379 = sshll.u32 %s377, 4
          %s380 = int_to_ptr.vmem [resolvable:$true] %s379
          %382 = dma.hbm_to_vmem [thread:$0]  %s376, 32, %s380, [#allocation3], 128, 128, 1
        $region44: #{tpu_custom_call.1} parent=39 // pred_fallthru
          _
        %s383 = sadd.s32 %s32, 1
        %p384 = scmp.lt.s32.totalorder %s383, 2
        // Predicated region
        $region45: #{tpu_custom_call.1} parent=39 // pred_check
          %p385 = pneg %p384
        $region46: #{tpu_custom_call.1} parent=39 // pred_check_branch
          %387 = sbr.rel (%p385) target = $region48
        $region47: #{tpu_custom_call.1} parent=39 // pred_region
          %p388 = scmp.lt.s32.totalorder %s383, 0
          %s389 = ssub.s32 0, %s383
          %s390 = scalar_select %p388, %s389, %s383
          %s391 = sand.u32 %s390, 1
          %s392 = ssub.s32 0, %s391
          %s393 = scalar_select %p388, %s392, %s391
          %p394 = scmp.ne.s32.totalorder %s393, 0
          %p395 = scmp.lt.s32.totalorder %s393, 0
          %p396 = pnand %p395, %p394
          %p397 = pneg %p396
          %s398 = sadd.s32 %s393, 2
          %s399 = scalar_select %p397, %s398, %s393
          %s400 = smul.u32 %s31, 16
          %s401 = smul.u32 %s383, 8
          %s402 = sadd.s32 %s400, %s401
          %s403 = sld [smem:[#allocation5 + %s402]]
          %s404 = sshrl.u32 %s403, 3
          %s405 = sand.u32 %s403, 7
          %s406 = smul.u32 %s404, 16
          %s407 = sadd.s32 %s405, %s406
          %s408 = smul.addr %s407, 16
          %s409 = scalar_lea.hbm %s1, %s408
          %s410 = smul.u32 %s399, 16
          %s411 = scalar_lea.vmem [#allocation2], %s410
          %s412 = scalar_lea.sflag [#allocation3], %s399
          %s414 = sshll.u32 %s411, 4
          %s415 = int_to_ptr.vmem [resolvable:$true] %s414
          %417 = dma.hbm_to_vmem [thread:$0]  %s409, 32, %s415, %s412, 128, 128, 1
          %s418 = sadd.s32 %s402, 1
          %s419 = sld [smem:[#allocation5 + %s418]]
          %s420 = sshrl.u32 %s419, 3
          %s421 = sand.u32 %s419, 7
          %s422 = smul.u32 %s420, 16
          %s423 = sadd.s32 %s421, %s422
          %s424 = smul.addr %s423, 16
          %s425 = scalar_lea.hbm %s1, %s424
          %s426 = sadd.s32 1, %s410
          %s427 = scalar_lea.vmem [#allocation2], %s426
          %s429 = sshll.u32 %s427, 4
          %s430 = int_to_ptr.vmem [resolvable:$true] %s429
          %432 = dma.hbm_to_vmem [thread:$0]  %s425, 32, %s430, %s412, 128, 128, 1
          %s433 = sadd.s32 %s402, 2
          %s434 = sld [smem:[#allocation5 + %s433]]
          %s435 = sshrl.u32 %s434, 3
          %s436 = sand.u32 %s434, 7
          %s437 = smul.u32 %s435, 16
          %s438 = sadd.s32 %s436, %s437
          %s439 = smul.addr %s438, 16
          %s440 = scalar_lea.hbm %s1, %s439
          %s441 = sadd.s32 2, %s410
          %s442 = scalar_lea.vmem [#allocation2], %s441
          %s444 = sshll.u32 %s442, 4
          %s445 = int_to_ptr.vmem [resolvable:$true] %s444
          %447 = dma.hbm_to_vmem [thread:$0]  %s440, 32, %s445, %s412, 128, 128, 1
          %s448 = sadd.s32 %s402, 3
          %s449 = sld [smem:[#allocation5 + %s448]]
          %s450 = sshrl.u32 %s449, 3
          %s451 = sand.u32 %s449, 7
          %s452 = smul.u32 %s450, 16
          %s453 = sadd.s32 %s451, %s452
          %s454 = smul.addr %s453, 16
          %s455 = scalar_lea.hbm %s1, %s454
          %s456 = sadd.s32 3, %s410
          %s457 = scalar_lea.vmem [#allocation2], %s456
          %s459 = sshll.u32 %s457, 4
          %s460 = int_to_ptr.vmem [resolvable:$true] %s459
          %462 = dma.hbm_to_vmem [thread:$0]  %s455, 32, %s460, %s412, 128, 128, 1
          %s463 = sadd.s32 %s402, 4
          %s464 = sld [smem:[#allocation5 + %s463]]
          %s465 = sshrl.u32 %s464, 3
          %s466 = sand.u32 %s464, 7
          %s467 = smul.u32 %s465, 16
          %s468 = sadd.s32 %s466, %s467
          %s469 = smul.addr %s468, 16
          %s470 = scalar_lea.hbm %s1, %s469
          %s471 = sadd.s32 4, %s410
          %s472 = scalar_lea.vmem [#allocation2], %s471
          %s474 = sshll.u32 %s472, 4
          %s475 = int_to_ptr.vmem [resolvable:$true] %s474
          %477 = dma.hbm_to_vmem [thread:$0]  %s470, 32, %s475, %s412, 128, 128, 1
          %s478 = sadd.s32 %s402, 5
          %s479 = sld [smem:[#allocation5 + %s478]]
          %s480 = sshrl.u32 %s479, 3
          %s481 = sand.u32 %s479, 7
          %s482 = smul.u32 %s480, 16
          %s483 = sadd.s32 %s481, %s482
          %s484 = smul.addr %s483, 16
          %s485 = scalar_lea.hbm %s1, %s484
          %s486 = sadd.s32 5, %s410
          %s487 = scalar_lea.vmem [#allocation2], %s486
          %s489 = sshll.u32 %s487, 4
          %s490 = int_to_ptr.vmem [resolvable:$true] %s489
          %492 = dma.hbm_to_vmem [thread:$0]  %s485, 32, %s490, %s412, 128, 128, 1
          %s493 = sadd.s32 %s402, 6
          %s494 = sld [smem:[#allocation5 + %s493]]
          %s495 = sshrl.u32 %s494, 3
          %s496 = sand.u32 %s494, 7
          %s497 = smul.u32 %s495, 16
          %s498 = sadd.s32 %s496, %s497
          %s499 = smul.addr %s498, 16
          %s500 = scalar_lea.hbm %s1, %s499
          %s501 = sadd.s32 6, %s410
          %s502 = scalar_lea.vmem [#allocation2], %s501
          %s504 = sshll.u32 %s502, 4
          %s505 = int_to_ptr.vmem [resolvable:$true] %s504
          %507 = dma.hbm_to_vmem [thread:$0]  %s500, 32, %s505, %s412, 128, 128, 1
          %s508 = sadd.s32 %s402, 7
          %s509 = sld [smem:[#allocation5 + %s508]]
          %s510 = sshrl.u32 %s509, 3
          %s511 = sand.u32 %s509, 7
          %s512 = smul.u32 %s510, 16
          %s513 = sadd.s32 %s511, %s512
          %s514 = smul.addr %s513, 16
          %s515 = scalar_lea.hbm %s1, %s514
          %s516 = sadd.s32 7, %s410
          %s517 = scalar_lea.vmem [#allocation2], %s516
          %s519 = sshll.u32 %s517, 4
          %s520 = int_to_ptr.vmem [resolvable:$true] %s519
          %522 = dma.hbm_to_vmem [thread:$0]  %s515, 32, %s520, %s412, 128, 128, 1
        $region48: #{tpu_custom_call.1} parent=39 // pred_fallthru
          _
        %s523 = smul.u32 %s267, 2
        %s524 = smul.addr %s523, 8
        %s525 = scalar_lea.vmem [#allocation2], %s524
        %s526 = scalar_lea.sflag [#allocation3], %s267
        %s527 = smul.u32 8, 1
        %s528 = smul.u32 %s527, 2
        %s529 = sshll.u32 %s528, 4
        %530 = dma.done %s526, %s529
        %s531 = smul.u32 %s32, 8
        %v532 = vld [vmem:[%s525] sm:$0xff]
        %v533 = vld [vmem:[%s525 + $0x8] sm:$0xff]
        %s534 = sshra.s32 %s531, 3
        %s535 = sand.u32 %s531, 7
        %s536 = smul.u32 %s534, 2
        %s537 = smul.addr %s536, 8
        %s538 = scalar_lea.vmem %s2, %s537
        %v539 = vld [vmem:[%s538] sm:$0xff]
        %v540 = vld [vmem:[%s538 + $0x8] sm:$0xff]
        %v541 = vadd.f32 %v532, %v539
        %v542 = vadd.f32 %v533, %v540
        %v543 = vld [vmem:[%s255] sm:$0xff]
        %vm544 = vcmp.eq.s32.totalorder %v543, 0
        %v545 = vld [vmem:[%s3] ss:$2 sm:$0x3]
        %s546 = scalar_lea.vmem %s3, 1
        %v547 = vld [vmem:[%s546] ss:$2 sm:$0x3]
        %v548 = vsel %vm544, 1, 0
        %549 = vset.pattern.permute.xlu0 0
        %550 = vperm.xlu0 %549, %v548
        %v551 = vpop.permute.xlu0 %550
        %vm552 = vcmp.eq.s32.totalorder %v551, 1
        %v554 = vlaneseq
        %v555 = vshrl.u32 %v554, 7
        %v556 = vsub.s32 0, %v555
        %v557 = vrot.slane %v545, %v556
        %v558 = vlaneseq
        %v559 = vshrl.u32 %v558, 7
        %v560 = vsub.s32 1, %v559
        %v561 = vrot.slane %v545, %v560
        %v565 = vlaneseq
        %v566 = vshrl.u32 %v565, 7
        %v567 = vsub.s32 0, %v566
        %v568 = vrot.slane %v547, %v567
        %v569 = vlaneseq
        %v570 = vshrl.u32 %v569, 7
        %v571 = vsub.s32 1, %v570
        %v572 = vrot.slane %v547, %v571
        %v575 = vsel %vm552, %v557, %v568
        %v576 = vsel %vm552, %v561, %v572
        %v577 = vadd.f32 %v541, %v575
        %v578 = vadd.f32 %v542, %v576
        %v579 = vadd.f32 %v577, %v578
        %580 = vadd.xlane.f32.xlu0 %v579
        %v581 = vpop.xlane.xlu0 %580
        %v582 = vrcp.pop 256.0
        %v583 = vmul.f32 %v581, %v582
        %v584 = vsub.f32 %v577, %v583
        %v585 = vsub.f32 %v578, %v583
        %v586 = vmul.f32 %v584, %v584
        %v587 = vmul.f32 %v585, %v585
        %v588 = vadd.f32 %v586, %v587
        %589 = vadd.xlane.f32.xlu0 %v588
        %v590 = vpop.xlane.xlu0 %589
        %v591 = vmul.f32 %v590, %v582
        %v592 = vadd.f32 %v591, 1e-12
        %v593 = vrsqrt.pop %v592
        %v594 = vmul.f32 %v584, %v593
        %v595 = vmul.f32 %v585, %v593
        %v596 = vld [vmem:[%s5] sm:$0x3]
        %v598 = vlaneseq
        %v599 = vshrl.u32 %v598, 7
        %v600 = vsub.s32 0, %v599
        %v601 = vrot.slane %v596, %v600
        %v602 = vlaneseq
        %v603 = vshrl.u32 %v602, 7
        %v604 = vsub.s32 1, %v603
        %v605 = vrot.slane %v596, %v604
        %v608 = vmul.f32 %v594, %v601
        %v609 = vmul.f32 %v595, %v605
        %v610 = vld [vmem:[%s6] sm:$0x3]
        %v612 = vlaneseq
        %v613 = vshrl.u32 %v612, 7
        %v614 = vsub.s32 0, %v613
        %v615 = vrot.slane %v610, %v614
        %v616 = vlaneseq
        %v617 = vshrl.u32 %v616, 7
        %v618 = vsub.s32 1, %v617
        %v619 = vrot.slane %v610, %v618
        %v622 = vadd.f32 %v608, %v615
        %v623 = vadd.f32 %v609, %v619
        %624 = vst [vmem:[%s247] sm:$0xff] %v622
        %625 = vst [vmem:[%s247 + $0x8] sm:$0xff] %v623
        %s626 = sand.u32 %s161, 1
        %s627 = scalar_lea.sflag [#allocation7], %s626
        %s628 = sand.u32 %s161, 1
        %s629 = smul.addr %s628, 16
        %s630 = scalar_lea.vmem [#allocation6], %s629
        // Predicated region
        $region49: #{tpu_custom_call.1} parent=39 // pred_check
          %p631 = pneg %p171
        $region50: #{tpu_custom_call.1} parent=39 // pred_check_branch
          %633 = sbr.rel (%p631) target = $region52
        $region51: #{tpu_custom_call.1} parent=39 // pred_region
          %s635 = ssub.s32 256, 256
          %636 = vsyncadd %s627, %s635
          %s637 = smul.addr %s32, 2
          %s638 = smul.addr %s31, 4
          %s639 = sadd.s32 %s637, %s638
          %s640 = smul.addr %s639, 128
          %s641 = scalar_lea.hbm %s7, %s640
          %s643 = sshll.u32 %s630, 4
          %s644 = int_to_ptr.vmem [resolvable:$true] %s643
          %646 = dma.vmem_to_hbm [thread:$0]  %s644, 256, %s641, %s627
        $region52: #{tpu_custom_call.1} parent=39 // pred_fallthru
          _
      $region40: #{tpu_custom_call.1} parent=5 // pred_fallthru
        _
      %p647 = scmp.le.s32.totalorder 2, %s22
      // Predicated region
      $region53: #{tpu_custom_call.1} parent=5 // pred_check
        %p648 = pneg %p647
      $region54: #{tpu_custom_call.1} parent=5 // pred_check_branch
        %650 = sbr.rel (%p648) target = $region56
      $region55: #{tpu_custom_call.1} parent=5 // pred_region
        %s651 = ssub.s32 %s22, 2
        // Predicated region
        $region57: #{tpu_custom_call.1} parent=55 // pred_check
          %p652 = pneg %p177
        $region58: #{tpu_custom_call.1} parent=55 // pred_check_branch
          %654 = sbr.rel (%p652) target = $region60
        $region59: #{tpu_custom_call.1} parent=55 // pred_region
          %s655 = sand.u32 %s162, 1
          %s656 = scalar_lea.sflag [#allocation7], %s655
          %s657 = sand.u32 %s162, 1
          %s658 = smul.addr %s657, 16
          %s659 = scalar_lea.vmem [#allocation6], %s658
          %660 = dma.done %s656, 256
        $region60: #{tpu_custom_call.1} parent=55 // pred_fallthru
          _
      $region56: #{tpu_custom_call.1} parent=5 // pred_fallthru
        _
    $region6: #{tpu_custom_call.1} parent=1 // loop_footer
      %s26 = sadd.s32 1, %s22
    $region7: #{tpu_custom_call.1} parent=1 // loop_footer_branch
      %21 = sbr.rel target = $region3
    $region8: #{tpu_custom_call.1} parent=1 // loop_exit
      _
    %661 = vsyncpa [#allocation7], 1
    %s662 = scalar_lea.sflag [#allocation7], 1
    %663 = vsyncpa %s662, 1
  %664 = vsyncmov [#allocation3]
  %s665 = vpop.sfrf %664
  %p666 = scmp.eq.s32.totalorder %s665, 0
  %p667 = pneg %p666
  %669 = shalt.err (%p667)
  %s670 = scalar_lea.sflag [#allocation3], 1
  %671 = vsyncmov %s670
  %s672 = vpop.sfrf %671
  %p673 = scmp.eq.s32.totalorder %s672, 0
  %p674 = pneg %p673
  %676 = shalt.err (%p674)

</llo_original>
